<compile_context>
chip_gen: v6e
topology: v6e:2x2x1
jax: 0.10.0
libtpu: 0.0.40
codegen_flags: <defaults>
</compile_context>

<pallas_src>
import functools

import jax
import jax.numpy as jnp
from jax.experimental import pallas as pl
from jax.experimental.pallas import tpu as pltpu


# ---------------------------------------------------------------------------
# Hardware-aware knobs
# ---------------------------------------------------------------------------
def _vmem_capacity_bytes():
    try:
        info = pltpu.get_tpu_info()
        cap = getattr(info, "vmem_capacity_bytes", None)
        if cap:
            return int(cap)
    except Exception:
        pass
    return 64 * 1024 * 1024  # conservative default (v7x per-TensorCore VMEM)


def _elementwise_dtype():
    """bf16 VPU/EUP exists on v6e and newer; keep f32 on v5e and older."""
    try:
        kind = jax.devices()[0].device_kind.lower()
    except Exception:
        return jnp.float32
    if any(t in kind for t in ("v6", "v7")):
        return jnp.bfloat16
    return jnp.float32


# ---------------------------------------------------------------------------
# Kernel 1: per-layer prepass (row-tiled).  For all heads at once:
#   Wh  = (x + svc_emb) @ W_packed          (N, H*Fout)  -> bf16 output
#   f12 = Wh @ A_blockdiag                  (N, 2*H)     -> f32 (logit halves)
# ---------------------------------------------------------------------------
def gat_prepass_kernel(x_ref, svc_ref, w_ref, abd_ref, wh_ref, f12_ref):
    h = x_ref[...] + svc_ref[...]
    wh = jnp.dot(h, w_ref[...], preferred_element_type=jnp.float32)
    wh_ref[...] = wh.astype(wh_ref.dtype)  # bf16 for the aggregation MXU pass
    # attention logit halves computed from the f32 Wh (keeps logit precision)
    f12_ref[...] = jnp.dot(wh, abd_ref[...], preferred_element_type=jnp.float32)


def _pick_prepass_tile(n):
    for cand in (512, 256, 128, 64, 32, 16):
        if cand <= n // 2 and n % cand == 0:
            return cand
    return n


def gat_prepass(x, svc_emb, w_packed, a_blockdiag, *, row_tile=None):
    N, Fin = x.shape
    HF = w_packed.shape[1]
    H2 = a_blockdiag.shape[1]
    if row_tile is None:
        row_tile = _pick_prepass_tile(N)
    assert N % row_tile == 0
    return pl.pallas_call(
        gat_prepass_kernel,
        out_shape=(jax.ShapeDtypeStruct((N, HF), jnp.bfloat16),
                   jax.ShapeDtypeStruct((N, H2), jnp.float32)),
        grid=(N // row_tile,),
        in_specs=[
            pl.BlockSpec((row_tile, Fin), lambda i: (i, 0)),  # x
            pl.BlockSpec((row_tile, Fin), lambda i: (i, 0)),  # svc_emb
            pl.BlockSpec((Fin, HF), lambda i: (0, 0)),        # packed W (all heads)
            pl.BlockSpec((HF, H2), lambda i: (0, 0)),         # block-diag a1|a2
        ],
        out_specs=(pl.BlockSpec((row_tile, HF), lambda i: (i, 0)),
                   pl.BlockSpec((row_tile, H2), lambda i: (i, 0))),
        compiler_params=pltpu.CompilerParams(
            dimension_semantics=("parallel",)),
    )(x, svc_emb, w_packed, a_blockdiag)


# ---------------------------------------------------------------------------
# Kernel 2: 2-D grid (row tiles x neighbor tiles) multi-head attention with
# online softmax, multiplicative masking, bf16 MXU aggregation and a single
# lane-dense output store per row tile.
# ---------------------------------------------------------------------------
def gat_attn_kernel(adj_ref, wh_ref, f1_ref, f2_ref, out_ref,
                    m_ref, l_ref, acc_ref, *,
                    alpha, concat, nheads, fout, tq, compute_dtype):
    ki = pl.program_id(1)

    @pl.when(ki == 0)
    def _init():
        m_ref[...] = jnp.full(m_ref.shape, -jnp.inf, m_ref.dtype)
        l_ref[...] = jnp.zeros(l_ref.shape, l_ref.dtype)
        acc_ref[...] = jnp.zeros(acc_ref.shape, acc_ref.dtype)

    # f1 is fully resident in VMEM; slice this grid step's row window in-kernel.
    row0 = pl.multiple_of(pl.program_id(0) * tq, tq)

    adjc = adj_ref[...].astype(compute_dtype)       # (tq, tk) 0/1 edge mask
    alpha_c = jnp.asarray(alpha, dtype=compute_dtype)

    # TODO(synk): switch to lax.fori_loop over heads (pl.ds slicing) if nheads
    # grows beyond ~4, to bound live (tq, tk) temporaries.
    for h in range(nheads):
        sl = slice(h * fout, (h + 1) * fout)
        f1_h = f1_ref[pl.ds(row0, tq), h:h + 1].astype(compute_dtype)  # (tq, 1)
        f2_h = f2_ref[h:h + 1, :].astype(compute_dtype)                # (1, tk)

        e = f1_h + f2_h                                # (tq, tk) raw logits
        e = jnp.maximum(e, alpha_c * e)                # LeakyReLU (alpha < 1)
        tile_max = jnp.max(e, axis=1, keepdims=True).astype(jnp.float32)

        m_old = m_ref[:, h:h + 1]                      # (tq, 1) running max (f32)
        m_new = jnp.maximum(m_old, tile_max)
        # Multiplicative masking: exp(e - m_new) <= 1 by construction; one VPU
        # multiply zeroes the non-edges (no compare / select / -9e15 path).
        p = jnp.exp(e - m_new.astype(compute_dtype)) * adjc           # (tq, tk)

        scale = jnp.exp(m_old - m_new)                 # (tq, 1) carry rescale
        l_ref[:, h:h + 1] = scale * l_ref[:, h:h + 1] + jnp.sum(
            p.astype(jnp.float32), axis=1, keepdims=True)
        pv = jnp.dot(p.astype(jnp.bfloat16), wh_ref[:, sl],
                     preferred_element_type=jnp.float32)               # (tq, fout)
        acc_ref[:, sl] = scale * acc_ref[:, sl] + pv
        m_ref[:, h:h + 1] = m_new

    @pl.when(ki == pl.num_programs(1) - 1)
    def _finalize():
        # Isolated rows (no edges at all) yield 0 here instead of pyGAT's uniform
        # average; self-loops (standard for GAT) make the two identical.
        inv = pl.reciprocal(jnp.maximum(l_ref[...], 1e-20), approx=True)  # (tq, H)
        for h in range(nheads):
            sl = slice(h * fout, (h + 1) * fout)
            acc_ref[:, sl] = acc_ref[:, sl] * inv[:, h:h + 1]
        res = acc_ref[...]                              # (tq, H*Fout) full width
        if concat:
            # safe ELU: expm1 only ever sees non-positive inputs
            res = jnp.where(res > 0, res, jnp.expm1(jnp.minimum(res, 0.0)))
        out_ref[...] = res.astype(out_ref.dtype)        # single lane-dense store


def _pick_tiles(n, hf, nheads):
    """Row/column tiles sized against real VMEM capacity, counting the f32
    intermediates (not just the int8 adjacency slab)."""
    cap = _vmem_capacity_bytes()
    budget = cap // 2  # headroom for double buffers & compiler scratch

    def vmem_need(tq, tk):
        adj = 2 * tq * tk                      # int8 slab, double-buffered
        wh = 2 * tk * hf * 2                   # bf16 Wh column tile, double-buffered
        f12 = 2 * (n * nheads * 4 + nheads * tk * 4)   # resident f1 + f2t tile
        out = 2 * tq * hf * 4
        scratch = tq * (2 * nheads + hf) * 4   # m, l, acc
        live = 4 * tq * tk * 4                 # e / p / mask temporaries (f32-equiv)
        return adj + wh + f12 + out + scratch + live

    for tq in (512, 256, 128, 64, 32):         # multiples of 32 (int8 sublanes)
        if tq > n or n % tq:
            continue
        if n >= 64 and tq > n // 2:            # keep >=2 row tiles (megacore balance)
            continue
        for tk in (1024, 512, 256, 128):       # multiples of 128 (lanes)
            if tk > n or n % tk:
                continue
            if vmem_need(tq, tk) <= budget:
                return tq, tk
    return n, n                                # tiny / odd graphs: full-extent blocks


def gat_attention_layer(adj_mask, wh, f1, f2t, *, alpha, concat, nheads, fout,
                        tq=None, tk=None):
    N = adj_mask.shape[0]
    HF = nheads * fout
    auto_tq, auto_tk = _pick_tiles(N, HF, nheads)
    tq = auto_tq if tq is None else tq
    tk = auto_tk if tk is None else tk
    assert N % tq == 0 and N % tk == 0, "tiles must divide N"

    compute_dtype = _elementwise_dtype()
    kernel = functools.partial(
        gat_attn_kernel, alpha=alpha, concat=concat, nheads=nheads, fout=fout,
        tq=tq, compute_dtype=compute_dtype)

    cost = pl.CostEstimate(
        flops=2 * N * N * HF + 7 * N * N * nheads,
        transcendentals=N * N * nheads,
        bytes_accessed=N * N                         # int8 adjacency (once)
        + (N // tq) * N * HF * 2                     # bf16 Wh re-streamed per row tile
        + N * HF * 4 + 8 * N * nheads,
    )
    vmem_limit = int(_vmem_capacity_bytes() * 0.8)
    return pl.pallas_call(
        kernel,
        out_shape=jax.ShapeDtypeStruct((N, HF), jnp.float32),
        grid=(N // tq, N // tk),
        in_specs=[
            pl.BlockSpec((tq, tk), lambda i, k: (i, k)),      # int8 adjacency slab
            pl.BlockSpec((tk, HF), lambda i, k: (k, 0)),      # bf16 Wh column tile
            pl.BlockSpec((N, nheads), lambda i, k: (0, 0)),   # f1: fully resident
            pl.BlockSpec((nheads, tk), lambda i, k: (0, k)),  # f2^T column tile
        ],
        out_specs=pl.BlockSpec((tq, HF), lambda i, k: (i, 0)),
        scratch_shapes=[
            pltpu.VMEM((tq, nheads), jnp.float32),            # running max m
            pltpu.VMEM((tq, nheads), jnp.float32),            # running sum l
            pltpu.VMEM((tq, HF), jnp.float32),                # output accumulator
        ],
        compiler_params=pltpu.CompilerParams(
            dimension_semantics=("parallel", "arbitrary"),
            vmem_limit_bytes=vmem_limit),
        cost_estimate=cost,
    )(adj_mask, wh, f1, f2t)


# ---------------------------------------------------------------------------
# Layer glue: pack per-head weights, run prepass + tiled attention.
# ---------------------------------------------------------------------------
def _pack_attention_blockdiag(a_list, fout):
    H = len(a_list)
    A = jnp.zeros((H * fout, 2 * H), jnp.float32)
    for h, a in enumerate(a_list):
        A = A.at[h * fout:(h + 1) * fout, h].set(a[:fout, 0])
        A = A.at[h * fout:(h + 1) * fout, H + h].set(a[fout:, 0])
    return A


def gat_layer_fused(x, svc_emb, adj_mask, w_list, a_list, *, alpha, concat,
                    tq=None, tk=None):
    """All heads of one GraphAttentionLayer; adjacency streamed once as int8."""
    nheads = len(w_list)
    fout = w_list[0].shape[1]
    w_packed = jnp.concatenate(w_list, axis=1)              # (Fin, H*Fout)
    a_bd = _pack_attention_blockdiag(a_list, fout)          # (H*Fout, 2H)
    wh, f12 = gat_prepass(x, svc_emb, w_packed, a_bd)       # wh bf16, f12 f32
    f1 = f12[:, :nheads]                                    # (N, H) source term
    f2t = jnp.transpose(f12[:, nheads:])                    # (H, N) lane-major target
    return gat_attention_layer(adj_mask, wh, f1, f2t, alpha=alpha, concat=concat,
                               nheads=nheads, fout=fout, tq=tq, tk=tk)


# ---------------------------------------------------------------------------
# GAT module forward (eval mode: dropout == identity)
# ---------------------------------------------------------------------------
def gat_forward(x, adj, svc_emb, params, *, alpha, nclass, tq=None, tk=None):
    adj_mask = (adj > 0).astype(jnp.int8)   # 4x fewer HBM bytes for the O(N^2) read

    # Hidden layer: all heads fused, concat along features (head-major, identical
    # to torch.cat([head_0, head_1, ...], dim=1)).
    w_h = [W for (W, _) in params["attentions"]]
    a_h = [a for (_, a) in params["attentions"]]
    x_hidden = gat_layer_fused(x, svc_emb, adj_mask, w_h, a_h,
                               alpha=alpha, concat=True, tq=tq, tk=tk)
    x_prime = x_hidden  # detach().clone() -> plain value copy in JAX semantics

    # Output layer: all heads fused, then mean over heads + ELU.
    w_o = [W for (W, _) in params["out_att"]]
    a_o = [a for (_, a) in params["out_att"]]
    out_packed = gat_layer_fused(x_hidden, svc_emb, adj_mask, w_o, a_o,
                                 alpha=alpha, concat=False, tq=tq, tk=tk)
    N = x.shape[0]
    nheads = len(w_o)
    x_out = out_packed.reshape(N, nheads, nclass).mean(axis=1)
    x_out = jax.nn.elu(x_out)
    return x_out, x_prime


# ---------------------------------------------------------------------------
# Pure-JAX reference (f32, mirrors pyGAT GraphAttentionLayer semantics)
# ---------------------------------------------------------------------------
def _gat_layer_reference(x, svc_emb, adj, w_list, a_list, *, alpha, concat):
    h = x + svc_emb
    outs = []
    for W, a in zip(w_list, a_list):
        fout = W.shape[1]
        wh = h @ W
        f1 = wh @ a[:fout]
        f2 = wh @ a[fout:]
        e = f1 + f2.T
        e = jnp.where(e > 0, e, alpha * e)
        e = jnp.where(adj > 0, e, -9e15)
        att = jax.nn.softmax(e, axis=1)
        hp = att @ wh
        if concat:
            hp = jax.nn.elu(hp)
        outs.append(hp)
    return outs


def gat_forward_reference(x, adj, svc_emb, params, *, alpha, nclass):
    w_h = [W for (W, _) in params["attentions"]]
    a_h = [a for (_, a) in params["attentions"]]
    hidden = jnp.concatenate(
        _gat_layer_reference(x, svc_emb, adj, w_h, a_h, alpha=alpha, concat=True),
        axis=1)
    w_o = [W for (W, _) in params["out_att"]]
    a_o = [a for (_, a) in params["out_att"]]
    outs = _gat_layer_reference(hidden, svc_emb, adj, w_o, a_o,
                                alpha=alpha, concat=False)
    out = jax.nn.elu(jnp.mean(jnp.stack(outs, axis=0), axis=0))
    return out, hidden


# ---------------------------------------------------------------------------
# Deterministic parameter init (xavier-uniform style, like pyGAT)
# ---------------------------------------------------------------------------
def xavier_uniform(key, shape):
    fan_in, fan_out = shape[0], shape[1]
    limit = jnp.sqrt(6.0 / (fan_in + fan_out))
    return jax.random.uniform(key, shape, jnp.float32, -limit, limit)


def init_params(key, nfeat, nhid, nclass, nheads):
    params = {"attentions": [], "out_att": []}
    for _ in range(nheads):
        key, k1, k2 = jax.random.split(key, 3)
        W = xavier_uniform(k1, (nfeat, nhid))
        a = xavier_uniform(k2, (2 * nhid, 1))
        params["attentions"].append((W, a))
    # NOTE: out_att layers are declared with in_features = nfeat, so nfeat must
    # equal nheads * nhid for the forward pass to be consistent.
    for _ in range(nheads):
        key, k1, k2 = jax.random.split(key, 3)
        W = xavier_uniform(k1, (nfeat, nclass))
        a = xavier_uniform(k2, (2 * nclass, 1))
        params["out_att"].append((W, a))
    return params


if __name__ == "__main__":
    # Small shapes consistent with the module: nfeat == nheads * nhid.
    N = 256
    nheads = 2
    nhid = 8
    nfeat = nheads * nhid   # 16
    nclass = 4
    alpha = 0.2
    # 4 row tiles x 2 neighbor tiles: exercises the online-softmax carry and
    # gives both v7x TensorCores balanced work.
    tq, tk = 64, 128

    key = jax.random.PRNGKey(0)
    key, kx, ks, ka, kp = jax.random.split(key, 5)

    x = jax.random.normal(kx, (N, nfeat), jnp.float32)
    svc_emb = jax.random.normal(ks, (N, nfeat), jnp.float32)

    # random 0/1 adjacency with self-loops
    adj = (jax.random.uniform(ka, (N, N)) > 0.5).astype(jnp.float32)
    adj = jnp.maximum(adj, jnp.eye(N, dtype=jnp.float32))

    params = init_params(kp, nfeat, nhid, nclass, nheads)

    out, x_prime = gat_forward(x, adj, svc_emb, params, alpha=alpha,
                               nclass=nclass, tq=tq, tk=tk)
    jax.block_until_ready((out, x_prime))

    ref_out, ref_xp = gat_forward_reference(x, adj, svc_emb, params,
                                            alpha=alpha, nclass=nclass)

    assert out.shape == (N, nclass)
    assert x_prime.shape == (N, nheads * nhid)
    assert bool(jnp.all(jnp.isfinite(out)))
    assert bool(jnp.all(jnp.isfinite(x_prime)))
    # loose tolerance: bf16 MXU operands + bf16 softmax pipeline + approx recip
    assert float(jnp.max(jnp.abs(out - ref_out))) < 5e-2
    assert float(jnp.max(jnp.abs(x_prime - ref_xp))) < 5e-2
    print("KERNEL_OK")
</pallas_src>

<mosaic_0001>
module attributes {stable_mosaic.version = 11 : i64} {
  func.func @gat_prepass_kernel(%arg0: i32, %arg1: memref<128x16xf32, #tpu.memory_space<vmem>>, %arg2: memref<128x16xf32, #tpu.memory_space<vmem>>, %arg3: memref<16x16xf32, #tpu.memory_space<vmem>>, %arg4: memref<16x4xf32, #tpu.memory_space<vmem>>, %arg5: memref<128x16xbf16, #tpu.memory_space<vmem>>, %arg6: memref<128x4xf32, #tpu.memory_space<vmem>>) attributes {dimension_semantics = [#tpu.dimension_semantics<parallel>], iteration_bounds = array<i64: 2>, scalar_prefetch = 0 : i64, scratch_operands = 0 : i64, tpu.core_type = #tpu.core_type<tc>, window_params = [{transform_indices = @transform_0, window_bounds = array<i64: 128, 16>}, {transform_indices = @transform_1, window_bounds = array<i64: 128, 16>}, {pipeline_mode = #tpu.pipeline_mode<synchronous>, transform_indices = @transform_2, window_bounds = array<i64: 16, 16>}, {pipeline_mode = #tpu.pipeline_mode<synchronous>, transform_indices = @transform_3, window_bounds = array<i64: 16, 4>}, {transform_indices = @transform_4, window_bounds = array<i64: 128, 16>}, {transform_indices = @transform_5, window_bounds = array<i64: 128, 4>}]} {
    %c0 = arith.constant 0 : index
    %c0_0 = arith.constant 0 : index
    %0 = vector.load %arg1[%c0, %c0_0] : memref<128x16xf32, #tpu.memory_space<vmem>>, vector<128x16xf32>
    %c0_1 = arith.constant 0 : index
    %c0_2 = arith.constant 0 : index
    %1 = vector.load %arg2[%c0_1, %c0_2] : memref<128x16xf32, #tpu.memory_space<vmem>>, vector<128x16xf32>
    %2 = arith.addf %0, %1 : vector<128x16xf32>
    %c0_3 = arith.constant 0 : index
    %c0_4 = arith.constant 0 : index
    %3 = vector.load %arg3[%c0_3, %c0_4] : memref<16x16xf32, #tpu.memory_space<vmem>>, vector<16x16xf32>
    %cst = arith.constant dense<0.000000e+00> : vector<128x16xf32>
    %4 = tpu.matmul %2, %3, %cst {dimension_numbers = #tpu.dot_dimension_numbers<[1], [0], [0], [1], [0, 0, 1, 1], [], []>} : vector<128x16xf32>, vector<16x16xf32>, vector<128x16xf32> -> vector<128x16xf32>
    %5 = arith.truncf %4 : vector<128x16xf32> to vector<128x16xbf16>
    %c0_5 = arith.constant 0 : index
    %c0_6 = arith.constant 0 : index
    %6 = vector.load %arg5[%c0_5, %c0_6] : memref<128x16xbf16, #tpu.memory_space<vmem>>, vector<128x16xbf16>
    tpu.vector_store %arg5[%c0_5, %c0_6], %5 {strides = array<i32>} : memref<128x16xbf16, #tpu.memory_space<vmem>>, vector<128x16xbf16>,
    %c0_7 = arith.constant 0 : index
    %c0_8 = arith.constant 0 : index
    %7 = vector.load %arg4[%c0_7, %c0_8] : memref<16x4xf32, #tpu.memory_space<vmem>>, vector<16x4xf32>
    %cst_9 = arith.constant dense<0.000000e+00> : vector<128x4xf32>
    %8 = tpu.matmul %4, %7, %cst_9 {dimension_numbers = #tpu.dot_dimension_numbers<[1], [0], [0], [1], [0, 0, 1, 1], [], []>} : vector<128x16xf32>, vector<16x4xf32>, vector<128x4xf32> -> vector<128x4xf32>
    %c0_10 = arith.constant 0 : index
    %c0_11 = arith.constant 0 : index
    %9 = vector.load %arg6[%c0_10, %c0_11] : memref<128x4xf32, #tpu.memory_space<vmem>>, vector<128x4xf32>
    tpu.vector_store %arg6[%c0_10, %c0_11], %8 {strides = array<i32>} : memref<128x4xf32, #tpu.memory_space<vmem>>, vector<128x4xf32>,
    return
  }
  func.func @transform_0(%arg0: i32) -> (i32, i32) {
    %c0_i32 = arith.constant 0 : i32
    %c0_i32_0 = arith.constant 0 : i32
    return %arg0, %c0_i32 : i32, i32
  }
  func.func @transform_1(%arg0: i32) -> (i32, i32) {
    %c0_i32 = arith.constant 0 : i32
    %c0_i32_0 = arith.constant 0 : i32
    return %arg0, %c0_i32 : i32, i32
  }
  func.func @transform_2(%arg0: i32) -> (i32, i32) {
    %c0_i32 = arith.constant 0 : i32
    %c0_i32_0 = arith.constant 0 : i32
    %c0_i32_1 = arith.constant 0 : i32
    return %c0_i32, %c0_i32_0 : i32, i32
  }
  func.func @transform_3(%arg0: i32) -> (i32, i32) {
    %c0_i32 = arith.constant 0 : i32
    %c0_i32_0 = arith.constant 0 : i32
    %c0_i32_1 = arith.constant 0 : i32
    return %c0_i32, %c0_i32_0 : i32, i32
  }
  func.func @transform_4(%arg0: i32) -> (i32, i32) {
    %c0_i32 = arith.constant 0 : i32
    %c0_i32_0 = arith.constant 0 : i32
    return %arg0, %c0_i32 : i32, i32
  }
  func.func @transform_5(%arg0: i32) -> (i32, i32) {
    %c0_i32 = arith.constant 0 : i32
    %c0_i32_0 = arith.constant 0 : i32
    return %arg0, %c0_i32 : i32, i32
  }
}

</mosaic_0001>

<llo_original>
// kernel: tpu_custom_call.1
$region0: #{tpu_custom_call.1}
  #allocation0 [shape = 'u32[]', space=smem, size = 0x4, offset = 0x4, fixed_abs, tag = 'smem constant byte address 0x4 - core index']
  #allocation1 [shape = 'u32[144,128]{1,0:T(1,128)}', space=vmem, size = 0x12000, scoped, tag = 'internal scratch']
  %s0 = inlined_call_operand.vmem [shape: f32[256,16], index: 0, kind: input, shape index: {}]
  %s1 = inlined_call_operand.vmem [shape: f32[256,16], index: 1, kind: input, shape index: {}]
  %s2 = inlined_call_operand.vmem [shape: f32[16,16], index: 2, kind: input, shape index: {}]
  %s3 = inlined_call_operand.vmem [shape: f32[16,4], index: 3, kind: input, shape index: {}]
  %s4 = inlined_call_operand.vmem [shape: bf16[256,16], index: 4, kind: output, shape index: {0}]
  %s5 = inlined_call_operand.vmem [shape: f32[256,4], index: 5, kind: output, shape index: {1}]
  %6 = xla_tuple %s4, %s5
  %s7 = sld [smem:[#allocation0]]
  $region57: #{tpu_custom_call.1} parent=0
    _
  %s9 = ssub.s32 1, %s7
  %s10 = scalar_select 0, %s9, %s7
  loop: start=0, step=1, limit=4
  $region2: #{tpu_custom_call.1} parent=0 // loop_pre_header
    _
  $region3: #{tpu_custom_call.1} parent=0 // loop_header
    %s12 = sphi 0, %s16
    %p13 = scmp.ge.s32.totalorder %s12, 4
    %s22 = sphi 0, %s24
    %s25 = sphi 0, %s22
    %s26 = sphi 0, %s25
    %s42 = sphi 0, %s26
    %s48 = sphi 0, %s50
    %s51 = sphi 0, %s48
    %s52 = sphi 0, %s51
    %s68 = sphi 0, %s52
    %s72 = sphi 0, %s72
    %s74 = sphi 0, %s72
    %s75 = sphi 0, %s74
    %s89 = sphi 0, %s75
    %s93 = sphi 0, %s93
    %s95 = sphi 0, %s93
    %s96 = sphi 0, %s95
    %s110 = sphi 0, %s96
    %s116 = sphi 0, %s118
    %s119 = sphi 0, %s116
    %s120 = sphi 0, %s119
    %s136 = sphi 0, %s120
    %s142 = sphi 0, %s144
    %s145 = sphi 0, %s142
    %s146 = sphi 0, %s145
    %s162 = sphi 0, %s146
  $region4: #{tpu_custom_call.1} parent=0 // loop_header_branch
    %15 = sbr.rel (%p13) target = $region8
  $region5: #{tpu_custom_call.1} parent=0 // loop_body
    %s17 = ssub.s32 %s12, 1
    %s18 = ssub.s32 %s12, 2
    %s19 = sadd.s32 %s12, 1
    %s20 = ssub.s32 %s12, %s19
    %p21 = scmp.eq.s32.totalorder %s20, 0
    %s23 = sadd.s32 %s22, 1
    %s24 = scalar_select %p21, %s22, %s23
    %p27 = pneg %p21
    %p28 = scmp.eq.s32.totalorder %s12, 1
    %p29 = por %p27, %p28
    %p30 = scmp.ne.s32.totalorder %s22, %s25
    %p31 = scmp.eq.s32.totalorder %s12, 0
    %p32 = por %p30, %p31
    %p33 = scmp.ne.s32.totalorder %s22, %s25
    %p34 = scmp.eq.s32.totalorder %s17, 1
    %p35 = por %p33, %p34
    %p36 = scmp.ne.s32.totalorder %s25, %s26
    %p37 = scmp.eq.s32.totalorder %s17, 0
    %p38 = por %p36, %p37
    %p39 = scmp.ne.s32.totalorder %s25, %s26
    %p40 = scmp.eq.s32.totalorder %s18, 1
    %p41 = por %p39, %p40
    %p43 = scmp.ne.s32.totalorder %s26, %s42
    %p44 = scmp.eq.s32.totalorder %s18, 0
    %p45 = por %p43, %p44
    %s46 = ssub.s32 %s12, %s19
    %p47 = scmp.eq.s32.totalorder %s46, 0
    %s49 = sadd.s32 %s48, 1
    %s50 = scalar_select %p47, %s48, %s49
    %p53 = pneg %p47
    %p54 = scmp.eq.s32.totalorder %s12, 1
    %p55 = por %p53, %p54
    %p56 = scmp.ne.s32.totalorder %s48, %s51
    %p57 = scmp.eq.s32.totalorder %s12, 0
    %p58 = por %p56, %p57
    %p59 = scmp.ne.s32.totalorder %s48, %s51
    %p60 = scmp.eq.s32.totalorder %s17, 1
    %p61 = por %p59, %p60
    %p62 = scmp.ne.s32.totalorder %s51, %s52
    %p63 = scmp.eq.s32.totalorder %s17, 0
    %p64 = por %p62, %p63
    %p65 = scmp.ne.s32.totalorder %s51, %s52
    %p66 = scmp.eq.s32.totalorder %s18, 1
    %p67 = por %p65, %p66
    %p69 = scmp.ne.s32.totalorder %s52, %s68
    %p70 = scmp.eq.s32.totalorder %s18, 0
    %p71 = por %p69, %p70
    %s73 = sadd.s32 %s72, 1
    %p76 = scmp.eq.s32.totalorder %s12, 1
    %p77 = scmp.ne.s32.totalorder %s72, %s74
    %p78 = scmp.eq.s32.totalorder %s12, 0
    %p79 = por %p77, %p78
    %p80 = scmp.ne.s32.totalorder %s72, %s74
    %p81 = scmp.eq.s32.totalorder %s17, 1
    %p82 = por %p80, %p81
    %p83 = scmp.ne.s32.totalorder %s74, %s75
    %p84 = scmp.eq.s32.totalorder %s17, 0
    %p85 = por %p83, %p84
    %p86 = scmp.ne.s32.totalorder %s74, %s75
    %p87 = scmp.eq.s32.totalorder %s18, 1
    %p88 = por %p86, %p87
    %p90 = scmp.ne.s32.totalorder %s75, %s89
    %p91 = scmp.eq.s32.totalorder %s18, 0
    %p92 = por %p90, %p91
    %s94 = sadd.s32 %s93, 1
    %p97 = scmp.eq.s32.totalorder %s12, 1
    %p98 = scmp.ne.s32.totalorder %s93, %s95
    %p99 = scmp.eq.s32.totalorder %s12, 0
    %p100 = por %p98, %p99
    %p101 = scmp.ne.s32.totalorder %s93, %s95
    %p102 = scmp.eq.s32.totalorder %s17, 1
    %p103 = por %p101, %p102
    %p104 = scmp.ne.s32.totalorder %s95, %s96
    %p105 = scmp.eq.s32.totalorder %s17, 0
    %p106 = por %p104, %p105
    %p107 = scmp.ne.s32.totalorder %s95, %s96
    %p108 = scmp.eq.s32.totalorder %s18, 1
    %p109 = por %p107, %p108
    %p111 = scmp.ne.s32.totalorder %s96, %s110
    %p112 = scmp.eq.s32.totalorder %s18, 0
    %p113 = por %p111, %p112
    %s114 = ssub.s32 %s12, %s19
    %p115 = scmp.eq.s32.totalorder %s114, 0
    %s117 = sadd.s32 %s116, 1
    %s118 = scalar_select %p115, %s116, %s117
    %p121 = pneg %p115
    %p122 = scmp.eq.s32.totalorder %s12, 1
    %p123 = por %p121, %p122
    %p124 = scmp.ne.s32.totalorder %s116, %s119
    %p125 = scmp.eq.s32.totalorder %s12, 0
    %p126 = por %p124, %p125
    %p127 = scmp.ne.s32.totalorder %s116, %s119
    %p128 = scmp.eq.s32.totalorder %s17, 1
    %p129 = por %p127, %p128
    %p130 = scmp.ne.s32.totalorder %s119, %s120
    %p131 = scmp.eq.s32.totalorder %s17, 0
    %p132 = por %p130, %p131
    %p133 = scmp.ne.s32.totalorder %s119, %s120
    %p134 = scmp.eq.s32.totalorder %s18, 1
    %p135 = por %p133, %p134
    %p137 = scmp.ne.s32.totalorder %s120, %s136
    %p138 = scmp.eq.s32.totalorder %s18, 0
    %p139 = por %p137, %p138
    %s140 = ssub.s32 %s12, %s19
    %p141 = scmp.eq.s32.totalorder %s140, 0
    %s143 = sadd.s32 %s142, 1
    %s144 = scalar_select %p141, %s142, %s143
    %p147 = pneg %p141
    %p148 = scmp.eq.s32.totalorder %s12, 1
    %p149 = por %p147, %p148
    %p150 = scmp.ne.s32.totalorder %s142, %s145
    %p151 = scmp.eq.s32.totalorder %s12, 0
    %p152 = por %p150, %p151
    %p153 = scmp.ne.s32.totalorder %s142, %s145
    %p154 = scmp.eq.s32.totalorder %s17, 1
    %p155 = por %p153, %p154
    %p156 = scmp.ne.s32.totalorder %s145, %s146
    %p157 = scmp.eq.s32.totalorder %s17, 0
    %p158 = por %p156, %p157
    %p159 = scmp.ne.s32.totalorder %s145, %s146
    %p160 = scmp.eq.s32.totalorder %s18, 1
    %p161 = por %p159, %p160
    %p163 = scmp.ne.s32.totalorder %s146, %s162
    %p164 = scmp.eq.s32.totalorder %s18, 0
    %p165 = por %p163, %p164
    %p166 = scmp.le.s32.totalorder 1, %s12
    %p167 = scmp.lt.s32.totalorder %s12, 3
    %p168 = pnand %p166, %p167
    %p169 = pneg %p168
    // Predicated region
    $region9: #{tpu_custom_call.1} parent=5 // pred_check
      _
    $region10: #{tpu_custom_call.1} parent=5 // pred_check_branch
      %171 = sbr.rel (%p168) target = $region12
    $region11: #{tpu_custom_call.1} parent=5 // pred_region
      %s172 = ssub.s32 %s12, 1
      // Predicated region
      $region13: #{tpu_custom_call.1} parent=11 // pred_check
        %p173 = pneg %p85
      $region14: #{tpu_custom_call.1} parent=11 // pred_check_branch
        %175 = sbr.rel (%p173) target = $region16
      $region15: #{tpu_custom_call.1} parent=11 // pred_region
        _
      $region16: #{tpu_custom_call.1} parent=11 // pred_fallthru
        _
      // Predicated region
      $region17: #{tpu_custom_call.1} parent=11 // pred_check
        %p176 = pneg %p106
      $region18: #{tpu_custom_call.1} parent=11 // pred_check_branch
        %178 = sbr.rel (%p176) target = $region20
      $region19: #{tpu_custom_call.1} parent=11 // pred_region
        _
      $region20: #{tpu_custom_call.1} parent=11 // pred_fallthru
        _
    $region12: #{tpu_custom_call.1} parent=5 // pred_fallthru
      _
    %p179 = scmp.lt.s32.totalorder %s12, 2
    // Predicated region
    $region21: #{tpu_custom_call.1} parent=5 // pred_check
      %p180 = pneg %p179
    $region22: #{tpu_custom_call.1} parent=5 // pred_check_branch
      %182 = sbr.rel (%p180) target = $region24
    $region23: #{tpu_custom_call.1} parent=5 // pred_region
      // Predicated region
      $region25: #{tpu_custom_call.1} parent=23 // pred_check
        %p183 = pneg %p32
      $region26: #{tpu_custom_call.1} parent=23 // pred_check_branch
        %185 = sbr.rel (%p183) target = $region28
      $region27: #{tpu_custom_call.1} parent=23 // pred_region
        %s186 = smul.u32 16, %s12
        %p187 = scmp.lt.s32.totalorder %s186, 31
        %s188 = scalar_select %p187, %s186, 31
        %s189 = smul.addr %s188, 8
        %s190 = scalar_lea.vmem %s0, %s189
        %s191 = smul.u32 16, %s12
      $region28: #{tpu_custom_call.1} parent=23 // pred_fallthru
        _
      // Predicated region
      $region29: #{tpu_custom_call.1} parent=23 // pred_check
        %p192 = pneg %p58
      $region30: #{tpu_custom_call.1} parent=23 // pred_check_branch
        %194 = sbr.rel (%p192) target = $region32
      $region31: #{tpu_custom_call.1} parent=23 // pred_region
        %s195 = smul.u32 16, %s12
        %p196 = scmp.lt.s32.totalorder %s195, 31
        %s197 = scalar_select %p196, %s195, 31
        %s198 = smul.addr %s197, 8
        %s199 = scalar_lea.vmem %s1, %s198
        %s200 = smul.u32 16, %s12
      $region32: #{tpu_custom_call.1} parent=23 // pred_fallthru
        _
    $region24: #{tpu_custom_call.1} parent=5 // pred_fallthru
      _
    %p201 = scmp.le.s32.totalorder 1, %s12
    %p202 = scmp.lt.s32.totalorder %s12, 3
    %p203 = pnand %p201, %p202
    %p204 = pneg %p203
    // Predicated region
    $region33: #{tpu_custom_call.1} parent=5 // pred_check
      _
    $region34: #{tpu_custom_call.1} parent=5 // pred_check_branch
      %206 = sbr.rel (%p203) target = $region36
    $region35: #{tpu_custom_call.1} parent=5 // pred_region
      %s207 = ssub.s32 %s12, 1
      %s208 = smul.u32 16, %s17
      %p209 = scmp.lt.s32.totalorder %s208, 31
      %s210 = scalar_select %p209, %s208, 31
      %s211 = smul.addr %s210, 8
      %s212 = scalar_lea.vmem %s0, %s211
      %p213 = pneg %p38
      %p214 = pneg %p35
      %s215 = smul.u32 16, %s17
      %p216 = scmp.lt.s32.totalorder %s215, 31
      %s217 = scalar_select %p216, %s215, 31
      %s218 = smul.addr %s217, 8
      %s219 = scalar_lea.vmem %s1, %s218
      %p220 = pneg %p64
      %p221 = pneg %p61
      %p222 = pneg %p85
      %p223 = pneg %p82
      %p224 = pneg %p106
      %p225 = pneg %p103
      %p226 = pneg %p132
      %p227 = pneg %p129
      %s228 = smul.u32 16, %s17
      %p229 = scmp.lt.s32.totalorder %s228, 31
      %s230 = scalar_select %p229, %s228, 31
      %s231 = smul.addr %s230, 4
      %s232 = scalar_lea.vmem %s4, %s231
      %p233 = pneg %p158
      %p234 = pneg %p155
      %s235 = smul.u32 16, %s17
      %p236 = scmp.lt.s32.totalorder %s235, 31
      %s237 = scalar_select %p236, %s235, 31
      %s238 = smul.addr %s237, 8
      %s239 = scalar_lea.vmem %s5, %s238
      %s240 = smul.u32 16, %s17
      %p241 = scmp.lt.s32.totalorder %s240, 31
      %s242 = scalar_select %p241, %s240, 31
      %s243 = smul.addr %s242, 8
      %s244 = scalar_lea.vmem %s0, %s243
      %s245 = smul.u32 16, %s17
      %s246 = smul.u32 16, %s17
      %p247 = scmp.lt.s32.totalorder %s246, 31
      %s248 = scalar_select %p247, %s246, 31
      %s249 = smul.addr %s248, 8
      %s250 = scalar_lea.vmem %s1, %s249
      %s251 = smul.u32 16, %s17
      %s252 = smul.u32 16, %s17
      %p253 = scmp.lt.s32.totalorder %s252, 31
      %s254 = scalar_select %p253, %s252, 31
      %s255 = smul.addr %s254, 4
      %s256 = scalar_lea.vmem %s4, %s255
      %s257 = smul.u32 16, %s17
      %s258 = smul.u32 16, %s17
      %p259 = scmp.lt.s32.totalorder %s258, 31
      %s260 = scalar_select %p259, %s258, 31
      %s261 = smul.addr %s260, 8
      %s262 = scalar_lea.vmem %s5, %s261
      %s263 = smul.u32 16, %s17
      %v264 = vld [vmem:[%s244] sm:$0xff]
      %v265 = vld [vmem:[%s244 + $0x8] sm:$0xff]
      %v266 = vld [vmem:[%s244 + $0x10] sm:$0xff]
      %v267 = vld [vmem:[%s244 + $0x18] sm:$0xff]
      %v268 = vld [vmem:[%s244 + $0x20] sm:$0xff]
      %v269 = vld [vmem:[%s244 + $0x28] sm:$0xff]
      %v270 = vld [vmem:[%s244 + $0x30] sm:$0xff]
      %v271 = vld [vmem:[%s244 + $0x38] sm:$0xff]
      %v272 = vld [vmem:[%s244 + $0x40] sm:$0xff]
      %v273 = vld [vmem:[%s244 + $0x48] sm:$0xff]
      %v274 = vld [vmem:[%s244 + $0x50] sm:$0xff]
      %v275 = vld [vmem:[%s244 + $0x58] sm:$0xff]
      %v276 = vld [vmem:[%s244 + $0x60] sm:$0xff]
      %v277 = vld [vmem:[%s244 + $0x68] sm:$0xff]
      %v278 = vld [vmem:[%s244 + $0x70] sm:$0xff]
      %v279 = vld [vmem:[%s244 + $0x78] sm:$0xff]
      %v280 = vld [vmem:[%s250] sm:$0xff]
      %v281 = vld [vmem:[%s250 + $0x8] sm:$0xff]
      %v282 = vld [vmem:[%s250 + $0x10] sm:$0xff]
      %v283 = vld [vmem:[%s250 + $0x18] sm:$0xff]
      %v284 = vld [vmem:[%s250 + $0x20] sm:$0xff]
      %v285 = vld [vmem:[%s250 + $0x28] sm:$0xff]
      %v286 = vld [vmem:[%s250 + $0x30] sm:$0xff]
      %v287 = vld [vmem:[%s250 + $0x38] sm:$0xff]
      %v288 = vld [vmem:[%s250 + $0x40] sm:$0xff]
      %v289 = vld [vmem:[%s250 + $0x48] sm:$0xff]
      %v290 = vld [vmem:[%s250 + $0x50] sm:$0xff]
      %v291 = vld [vmem:[%s250 + $0x58] sm:$0xff]
      %v292 = vld [vmem:[%s250 + $0x60] sm:$0xff]
      %v293 = vld [vmem:[%s250 + $0x68] sm:$0xff]
      %v294 = vld [vmem:[%s250 + $0x70] sm:$0xff]
      %v295 = vld [vmem:[%s250 + $0x78] sm:$0xff]
      %v296 = vadd.f32 %v264, %v280
      %v297 = vadd.f32 %v265, %v281
      %v298 = vadd.f32 %v266, %v282
      %v299 = vadd.f32 %v267, %v283
      %v300 = vadd.f32 %v268, %v284
      %v301 = vadd.f32 %v269, %v285
      %v302 = vadd.f32 %v270, %v286
      %v303 = vadd.f32 %v271, %v287
      %v304 = vadd.f32 %v272, %v288
      %v305 = vadd.f32 %v273, %v289
      %v306 = vadd.f32 %v274, %v290
      %v307 = vadd.f32 %v275, %v291
      %v308 = vadd.f32 %v276, %v292
      %v309 = vadd.f32 %v277, %v293
      %v310 = vadd.f32 %v278, %v294
      %v311 = vadd.f32 %v279, %v295
      %v312 = vld [vmem:[%s2] sm:$0xff]
      %v313 = vld [vmem:[%s2 + $0x8] sm:$0xff]
      %vm314 = vcmask 130048
      %v316 = vsel %vm314, %v296, 0
      %v319 = vsel %vm314, %v297, 0
      %v322 = vsel %vm314, %v298, 0
      %v325 = vsel %vm314, %v299, 0
      %v328 = vsel %vm314, %v300, 0
      %v331 = vsel %vm314, %v301, 0
      %v334 = vsel %vm314, %v302, 0
      %v337 = vsel %vm314, %v303, 0
      %v340 = vsel %vm314, %v304, 0
      %v343 = vsel %vm314, %v305, 0
      %v346 = vsel %vm314, %v306, 0
      %v349 = vsel %vm314, %v307, 0
      %v352 = vsel %vm314, %v308, 0
      %v355 = vsel %vm314, %v309, 0
      %v358 = vsel %vm314, %v310, 0
      %v361 = vsel %vm314, %v311, 0
      %363 = vmatprep.subr.mxu0 0.0
      %364 = vmatpush1.msra.mxu0 0.0
      %365 = vmatprep.subr.mxu0 0.0
      %366 = vmatpush1.msra.mxu0 0.0
      %367 = vmatprep.subr.mxu0 0.0
      %368 = vmatpush1.msra.mxu0 0.0
      %369 = vmatprep.subr.mxu0 0.0
      %370 = vmatpush1.msra.mxu0 0.0
      %371 = vmatprep.subr.mxu0 0.0
      %372 = vmatpush1.msra.mxu0 0.0
      %373 = vmatprep.subr.mxu0 0.0
      %374 = vmatpush1.msra.mxu0 0.0
      %375 = vmatprep.subr.mxu0 0.0
      %376 = vmatpush1.msra.mxu0 0.0
      %377 = vmatprep.subr.mxu0 0.0
      %378 = vmatpush1.msra.mxu0 0.0
      %379 = vmatprep.subr.mxu0 0.0
      %380 = vmatpush1.msra.mxu0 0.0
      %381 = vmatprep.subr.mxu0 0.0
      %382 = vmatpush1.msra.mxu0 0.0
      %383 = vmatprep.subr.mxu0 0.0
      %384 = vmatpush1.msra.mxu0 0.0
      %385 = vmatprep.subr.mxu0 0.0
      %386 = vmatpush1.msra.mxu0 0.0
      %387 = vmatprep.subr.mxu0 0.0
      %388 = vmatpush1.msra.mxu0 0.0
      %389 = vmatprep.subr.mxu0 0.0
      %390 = vmatpush1.msra.mxu0 0.0
      %391 = vmatprep.subr.mxu0 0.0
      %392 = vmatpush1.msra.mxu0 %v313
      %393 = vmatprep.subr.mxu0 0.0
      %394 = vmatpush1.msra.mxu0 %v312
      %395 = vmatprep.subr.mxu0 0.0
      %396 = vmatpush2.msra.mxu0 0.0
      %397 = vmatprep.subr.mxu0 0.0
      %398 = vmatpush2.msra.mxu0 0.0
      %399 = vmatprep.subr.mxu0 0.0
      %400 = vmatpush2.msra.mxu0 0.0
      %401 = vmatprep.subr.mxu0 0.0
      %402 = vmatpush2.msra.mxu0 0.0
      %403 = vmatprep.subr.mxu0 0.0
      %404 = vmatpush2.msra.mxu0 0.0
      %405 = vmatprep.subr.mxu0 0.0
      %406 = vmatpush2.msra.mxu0 0.0
      %407 = vmatprep.subr.mxu0 0.0
      %408 = vmatpush2.msra.mxu0 0.0
      %409 = vmatprep.subr.mxu0 0.0
      %410 = vmatpush2.msra.mxu0 0.0
      %411 = vmatprep.subr.mxu0 0.0
      %412 = vmatpush2.msra.mxu0 0.0
      %413 = vmatprep.subr.mxu0 0.0
      %414 = vmatpush2.msra.mxu0 0.0
      %415 = vmatprep.subr.mxu0 0.0
      %416 = vmatpush2.msra.mxu0 0.0
      %417 = vmatprep.subr.mxu0 0.0
      %418 = vmatpush2.msra.mxu0 0.0
      %419 = vmatprep.subr.mxu0 0.0
      %420 = vmatpush2.msra.mxu0 0.0
      %421 = vmatprep.subr.mxu0 0.0
      %422 = vmatpush2.msra.mxu0 0.0
      %423 = vmatprep.subr.mxu0 0.0
      %424 = vmatpush2.msra.mxu0 0.0
      %425 = vmatprep.subr.mxu0 0.0
      %426 = vmatpush2.msra.mxu0 0.0
      %427 = vmatprep.mubr.f32.mxu0 0.0
      %428 = vmatmul.mubr.f32.gmra.mxu0 %v316
      %v429 = vpop.f32.mrf.mxu0
      %v430 = vadd.f32 0.0, %v429
      %v431 = vpop.f32.mrf.mxu0
      %432 = vmatprep.mubr.f32.mxu0 0.0
      %433 = vmatmul.mubr.f32.gmra.mxu0 %v319
      %v434 = vpop.f32.mrf.mxu0
      %v435 = vadd.f32 0.0, %v434
      %v436 = vpop.f32.mrf.mxu0
      %437 = vmatprep.mubr.f32.mxu0 0.0
      %438 = vmatmul.mubr.f32.gmra.mxu0 %v322
      %v439 = vpop.f32.mrf.mxu0
      %v440 = vadd.f32 0.0, %v439
      %v441 = vpop.f32.mrf.mxu0
      %442 = vmatprep.mubr.f32.mxu0 0.0
      %443 = vmatmul.mubr.f32.gmra.mxu0 %v325
      %v444 = vpop.f32.mrf.mxu0
      %v445 = vadd.f32 0.0, %v444
      %v446 = vpop.f32.mrf.mxu0
      %447 = vmatprep.mubr.f32.mxu0 0.0
      %448 = vmatmul.mubr.f32.gmra.mxu0 %v328
      %v449 = vpop.f32.mrf.mxu0
      %v450 = vadd.f32 0.0, %v449
      %v451 = vpop.f32.mrf.mxu0
      %452 = vmatprep.mubr.f32.mxu0 0.0
      %453 = vmatmul.mubr.f32.gmra.mxu0 %v331
      %v454 = vpop.f32.mrf.mxu0
      %v455 = vadd.f32 0.0, %v454
      %v456 = vpop.f32.mrf.mxu0
      %457 = vmatprep.mubr.f32.mxu0 0.0
      %458 = vmatmul.mubr.f32.gmra.mxu0 %v334
      %v459 = vpop.f32.mrf.mxu0
      %v460 = vadd.f32 0.0, %v459
      %v461 = vpop.f32.mrf.mxu0
      %462 = vmatprep.mubr.f32.mxu0 0.0
      %463 = vmatmul.mubr.f32.gmra.mxu0 %v337
      %v464 = vpop.f32.mrf.mxu0
      %v465 = vadd.f32 0.0, %v464
      %v466 = vpop.f32.mrf.mxu0
      %467 = vmatprep.mubr.f32.mxu0 0.0
      %468 = vmatmul.mubr.f32.gmra.mxu0 %v340
      %v469 = vpop.f32.mrf.mxu0
      %v470 = vadd.f32 0.0, %v469
      %v471 = vpop.f32.mrf.mxu0
      %472 = vmatprep.mubr.f32.mxu0 0.0
      %473 = vmatmul.mubr.f32.gmra.mxu0 %v343
      %v474 = vpop.f32.mrf.mxu0
      %v475 = vadd.f32 0.0, %v474
      %v476 = vpop.f32.mrf.mxu0
      %477 = vmatprep.mubr.f32.mxu0 0.0
      %478 = vmatmul.mubr.f32.gmra.mxu0 %v346
      %v479 = vpop.f32.mrf.mxu0
      %v480 = vadd.f32 0.0, %v479
      %v481 = vpop.f32.mrf.mxu0
      %482 = vmatprep.mubr.f32.mxu0 0.0
      %483 = vmatmul.mubr.f32.gmra.mxu0 %v349
      %v484 = vpop.f32.mrf.mxu0
      %v485 = vadd.f32 0.0, %v484
      %v486 = vpop.f32.mrf.mxu0
      %487 = vmatprep.mubr.f32.mxu0 0.0
      %488 = vmatmul.mubr.f32.gmra.mxu0 %v352
      %v489 = vpop.f32.mrf.mxu0
      %v490 = vadd.f32 0.0, %v489
      %v491 = vpop.f32.mrf.mxu0
      %492 = vmatprep.mubr.f32.mxu0 0.0
      %493 = vmatmul.mubr.f32.gmra.mxu0 %v355
      %v494 = vpop.f32.mrf.mxu0
      %v495 = vadd.f32 0.0, %v494
      %v496 = vpop.f32.mrf.mxu0
      %497 = vmatprep.mubr.f32.mxu0 0.0
      %498 = vmatmul.mubr.f32.gmra.mxu0 %v358
      %v499 = vpop.f32.mrf.mxu0
      %v500 = vadd.f32 0.0, %v499
      %v501 = vpop.f32.mrf.mxu0
      %502 = vmatprep.mubr.f32.mxu0 0.0
      %503 = vmatmul.mubr.f32.gmra.mxu0 %v361
      %v504 = vpop.f32.mrf.mxu0
      %v505 = vadd.f32 0.0, %v504
      %v506 = vpop.f32.mrf.mxu0
      %507 = vdwg.mxu0
      %v508 = vpack.c.bf16 %v435, %v430
      %v509 = vpack.c.bf16 %v445, %v440
      %v510 = vpack.c.bf16 %v455, %v450
      %v511 = vpack.c.bf16 %v465, %v460
      %v512 = vpack.c.bf16 %v475, %v470
      %v513 = vpack.c.bf16 %v485, %v480
      %v514 = vpack.c.bf16 %v495, %v490
      %v515 = vpack.c.bf16 %v505, %v500
      %v524 = vunpack.c.l.b16 %v508
      %v525 = vunpack.c.h.b16 %v508
      %v526 = vunpack.c.l.b16 %v509
      %v527 = vunpack.c.h.b16 %v509
      %v528 = vunpack.c.l.b16 %v510
      %v529 = vunpack.c.h.b16 %v510
      %v530 = vunpack.c.l.b16 %v511
      %v531 = vunpack.c.h.b16 %v511
      %v532 = vunpack.c.l.b16 %v512
      %v533 = vunpack.c.h.b16 %v512
      %v534 = vunpack.c.l.b16 %v513
      %v535 = vunpack.c.h.b16 %v513
      %v536 = vunpack.c.l.b16 %v514
      %v537 = vunpack.c.h.b16 %v514
      %v538 = vunpack.c.l.b16 %v515
      %v539 = vunpack.c.h.b16 %v515
      %v540 = vpack.c.b16 %v524, %v524
      %v541 = vpack.c.b16 %v525, %v525
      %v542 = vpack.c.b16 %v526, %v526
      %v543 = vpack.c.b16 %v527, %v527
      %v544 = vpack.c.b16 %v528, %v528
      %v545 = vpack.c.b16 %v529, %v529
      %v546 = vpack.c.b16 %v530, %v530
      %v547 = vpack.c.b16 %v531, %v531
      %v548 = vpack.c.b16 %v532, %v532
      %v549 = vpack.c.b16 %v533, %v533
      %v550 = vpack.c.b16 %v534, %v534
      %v551 = vpack.c.b16 %v535, %v535
      %v552 = vpack.c.b16 %v536, %v536
      %v553 = vpack.c.b16 %v537, %v537
      %v554 = vpack.c.b16 %v538, %v538
      %v555 = vpack.c.b16 %v539, %v539
      %vm572 = vcmask 125952
      %573 = vst.msk [vmem:[%s256] sm:$0xf] %vm572, %v540
      %574 = vst.msk [vmem:[%s256 + $0x4] sm:$0xf] %vm572, %v541
      %575 = vst.msk [vmem:[%s256 + $0x8] sm:$0xf] %vm572, %v542
      %576 = vst.msk [vmem:[%s256 + $0xc] sm:$0xf] %vm572, %v543
      %577 = vst.msk [vmem:[%s256 + $0x10] sm:$0xf] %vm572, %v544
      %578 = vst.msk [vmem:[%s256 + $0x14] sm:$0xf] %vm572, %v545
      %579 = vst.msk [vmem:[%s256 + $0x18] sm:$0xf] %vm572, %v546
      %580 = vst.msk [vmem:[%s256 + $0x1c] sm:$0xf] %vm572, %v547
      %581 = vst.msk [vmem:[%s256 + $0x20] sm:$0xf] %vm572, %v548
      %582 = vst.msk [vmem:[%s256 + $0x24] sm:$0xf] %vm572, %v549
      %583 = vst.msk [vmem:[%s256 + $0x28] sm:$0xf] %vm572, %v550
      %584 = vst.msk [vmem:[%s256 + $0x2c] sm:$0xf] %vm572, %v551
      %585 = vst.msk [vmem:[%s256 + $0x30] sm:$0xf] %vm572, %v552
      %586 = vst.msk [vmem:[%s256 + $0x34] sm:$0xf] %vm572, %v553
      %587 = vst.msk [vmem:[%s256 + $0x38] sm:$0xf] %vm572, %v554
      %588 = vst.msk [vmem:[%s256 + $0x3c] sm:$0xf] %vm572, %v555
      %v589 = vld [vmem:[%s3] sm:$0xff]
      %v590 = vld [vmem:[%s3 + $0x8] sm:$0xff]
      %v592 = vsel %vm314, %v430, 0
      %v595 = vsel %vm314, %v435, 0
      %v598 = vsel %vm314, %v440, 0
      %v601 = vsel %vm314, %v445, 0
      %v604 = vsel %vm314, %v450, 0
      %v607 = vsel %vm314, %v455, 0
      %v610 = vsel %vm314, %v460, 0
      %v613 = vsel %vm314, %v465, 0
      %v616 = vsel %vm314, %v470, 0
      %v619 = vsel %vm314, %v475, 0
      %v622 = vsel %vm314, %v480, 0
      %v625 = vsel %vm314, %v485, 0
      %v628 = vsel %vm314, %v490, 0
      %v631 = vsel %vm314, %v495, 0
      %v634 = vsel %vm314, %v500, 0
      %v637 = vsel %vm314, %v505, 0
      %639 = vmatprep.subr.mxu0 0.0
      %640 = vmatpush1.msra.mxu0 0.0
      %641 = vmatprep.subr.mxu0 0.0
      %642 = vmatpush1.msra.mxu0 0.0
      %643 = vmatprep.subr.mxu0 0.0
      %644 = vmatpush1.msra.mxu0 0.0
      %645 = vmatprep.subr.mxu0 0.0
      %646 = vmatpush1.msra.mxu0 0.0
      %647 = vmatprep.subr.mxu0 0.0
      %648 = vmatpush1.msra.mxu0 0.0
      %649 = vmatprep.subr.mxu0 0.0
      %650 = vmatpush1.msra.mxu0 0.0
      %651 = vmatprep.subr.mxu0 0.0
      %652 = vmatpush1.msra.mxu0 0.0
      %653 = vmatprep.subr.mxu0 0.0
      %654 = vmatpush1.msra.mxu0 0.0
      %655 = vmatprep.subr.mxu0 0.0
      %656 = vmatpush1.msra.mxu0 0.0
      %657 = vmatprep.subr.mxu0 0.0
      %658 = vmatpush1.msra.mxu0 0.0
      %659 = vmatprep.subr.mxu0 0.0
      %660 = vmatpush1.msra.mxu0 0.0
      %661 = vmatprep.subr.mxu0 0.0
      %662 = vmatpush1.msra.mxu0 0.0
      %663 = vmatprep.subr.mxu0 0.0
      %664 = vmatpush1.msra.mxu0 0.0
      %665 = vmatprep.subr.mxu0 0.0
      %666 = vmatpush1.msra.mxu0 0.0
      %667 = vmatprep.subr.mxu0 0.0
      %668 = vmatpush1.msra.mxu0 %v590
      %669 = vmatprep.subr.mxu0 0.0
      %670 = vmatpush1.msra.mxu0 %v589
      %671 = vmatprep.subr.mxu0 0.0
      %672 = vmatpush2.msra.mxu0 0.0
      %673 = vmatprep.subr.mxu0 0.0
      %674 = vmatpush2.msra.mxu0 0.0
      %675 = vmatprep.subr.mxu0 0.0
      %676 = vmatpush2.msra.mxu0 0.0
      %677 = vmatprep.subr.mxu0 0.0
      %678 = vmatpush2.msra.mxu0 0.0
      %679 = vmatprep.subr.mxu0 0.0
      %680 = vmatpush2.msra.mxu0 0.0
      %681 = vmatprep.subr.mxu0 0.0
      %682 = vmatpush2.msra.mxu0 0.0
      %683 = vmatprep.subr.mxu0 0.0
      %684 = vmatpush2.msra.mxu0 0.0
      %685 = vmatprep.subr.mxu0 0.0
      %686 = vmatpush2.msra.mxu0 0.0
      %687 = vmatprep.subr.mxu0 0.0
      %688 = vmatpush2.msra.mxu0 0.0
      %689 = vmatprep.subr.mxu0 0.0
      %690 = vmatpush2.msra.mxu0 0.0
      %691 = vmatprep.subr.mxu0 0.0
      %692 = vmatpush2.msra.mxu0 0.0
      %693 = vmatprep.subr.mxu0 0.0
      %694 = vmatpush2.msra.mxu0 0.0
      %695 = vmatprep.subr.mxu0 0.0
      %696 = vmatpush2.msra.mxu0 0.0
      %697 = vmatprep.subr.mxu0 0.0
      %698 = vmatpush2.msra.mxu0 0.0
      %699 = vmatprep.subr.mxu0 0.0
      %700 = vmatpush2.msra.mxu0 0.0
      %701 = vmatprep.subr.mxu0 0.0
      %702 = vmatpush2.msra.mxu0 0.0
      %703 = vmatprep.mubr.f32.mxu0 0.0
      %704 = vmatmul.mubr.f32.gmra.mxu0 %v592
      %v705 = vpop.f32.mrf.mxu0
      %v706 = vadd.f32 0.0, %v705
      %v707 = vpop.f32.mrf.mxu0
      %708 = vmatprep.mubr.f32.mxu0 0.0
      %709 = vmatmul.mubr.f32.gmra.mxu0 %v595
      %v710 = vpop.f32.mrf.mxu0
      %v711 = vadd.f32 0.0, %v710
      %v712 = vpop.f32.mrf.mxu0
      %713 = vmatprep.mubr.f32.mxu0 0.0
      %714 = vmatmul.mubr.f32.gmra.mxu0 %v598
      %v715 = vpop.f32.mrf.mxu0
      %v716 = vadd.f32 0.0, %v715
      %v717 = vpop.f32.mrf.mxu0
      %718 = vmatprep.mubr.f32.mxu0 0.0
      %719 = vmatmul.mubr.f32.gmra.mxu0 %v601
      %v720 = vpop.f32.mrf.mxu0
      %v721 = vadd.f32 0.0, %v720
      %v722 = vpop.f32.mrf.mxu0
      %723 = vmatprep.mubr.f32.mxu0 0.0
      %724 = vmatmul.mubr.f32.gmra.mxu0 %v604
      %v725 = vpop.f32.mrf.mxu0
      %v726 = vadd.f32 0.0, %v725
      %v727 = vpop.f32.mrf.mxu0
      %728 = vmatprep.mubr.f32.mxu0 0.0
      %729 = vmatmul.mubr.f32.gmra.mxu0 %v607
      %v730 = vpop.f32.mrf.mxu0
      %v731 = vadd.f32 0.0, %v730
      %v732 = vpop.f32.mrf.mxu0
      %733 = vmatprep.mubr.f32.mxu0 0.0
      %734 = vmatmul.mubr.f32.gmra.mxu0 %v610
      %v735 = vpop.f32.mrf.mxu0
      %v736 = vadd.f32 0.0, %v735
      %v737 = vpop.f32.mrf.mxu0
      %738 = vmatprep.mubr.f32.mxu0 0.0
      %739 = vmatmul.mubr.f32.gmra.mxu0 %v613
      %v740 = vpop.f32.mrf.mxu0
      %v741 = vadd.f32 0.0, %v740
      %v742 = vpop.f32.mrf.mxu0
      %743 = vmatprep.mubr.f32.mxu0 0.0
      %744 = vmatmul.mubr.f32.gmra.mxu0 %v616
      %v745 = vpop.f32.mrf.mxu0
      %v746 = vadd.f32 0.0, %v745
      %v747 = vpop.f32.mrf.mxu0
      %748 = vmatprep.mubr.f32.mxu0 0.0
      %749 = vmatmul.mubr.f32.gmra.mxu0 %v619
      %v750 = vpop.f32.mrf.mxu0
      %v751 = vadd.f32 0.0, %v750
      %v752 = vpop.f32.mrf.mxu0
      %753 = vmatprep.mubr.f32.mxu0 0.0
      %754 = vmatmul.mubr.f32.gmra.mxu0 %v622
      %v755 = vpop.f32.mrf.mxu0
      %v756 = vadd.f32 0.0, %v755
      %v757 = vpop.f32.mrf.mxu0
      %758 = vmatprep.mubr.f32.mxu0 0.0
      %759 = vmatmul.mubr.f32.gmra.mxu0 %v625
      %v760 = vpop.f32.mrf.mxu0
      %v761 = vadd.f32 0.0, %v760
      %v762 = vpop.f32.mrf.mxu0
      %763 = vmatprep.mubr.f32.mxu0 0.0
      %764 = vmatmul.mubr.f32.gmra.mxu0 %v628
      %v765 = vpop.f32.mrf.mxu0
      %v766 = vadd.f32 0.0, %v765
      %v767 = vpop.f32.mrf.mxu0
      %768 = vmatprep.mubr.f32.mxu0 0.0
      %769 = vmatmul.mubr.f32.gmra.mxu0 %v631
      %v770 = vpop.f32.mrf.mxu0
      %v771 = vadd.f32 0.0, %v770
      %v772 = vpop.f32.mrf.mxu0
      %773 = vmatprep.mubr.f32.mxu0 0.0
      %774 = vmatmul.mubr.f32.gmra.mxu0 %v634
      %v775 = vpop.f32.mrf.mxu0
      %v776 = vadd.f32 0.0, %v775
      %v777 = vpop.f32.mrf.mxu0
      %778 = vmatprep.mubr.f32.mxu0 0.0
      %779 = vmatmul.mubr.f32.gmra.mxu0 %v637
      %v780 = vpop.f32.mrf.mxu0
      %v781 = vadd.f32 0.0, %v780
      %v782 = vpop.f32.mrf.mxu0
      %783 = vdwg.mxu0
      %vm784 = vcmask 31744
      %785 = vst.msk [vmem:[%s262] sm:$0xff] %vm784, %v706
      %786 = vst.msk [vmem:[%s262 + $0x8] sm:$0xff] %vm784, %v711
      %787 = vst.msk [vmem:[%s262 + $0x10] sm:$0xff] %vm784, %v716
      %788 = vst.msk [vmem:[%s262 + $0x18] sm:$0xff] %vm784, %v721
      %789 = vst.msk [vmem:[%s262 + $0x20] sm:$0xff] %vm784, %v726
      %790 = vst.msk [vmem:[%s262 + $0x28] sm:$0xff] %vm784, %v731
      %791 = vst.msk [vmem:[%s262 + $0x30] sm:$0xff] %vm784, %v736
      %792 = vst.msk [vmem:[%s262 + $0x38] sm:$0xff] %vm784, %v741
      %793 = vst.msk [vmem:[%s262 + $0x40] sm:$0xff] %vm784, %v746
      %794 = vst.msk [vmem:[%s262 + $0x48] sm:$0xff] %vm784, %v751
      %795 = vst.msk [vmem:[%s262 + $0x50] sm:$0xff] %vm784, %v756
      %796 = vst.msk [vmem:[%s262 + $0x58] sm:$0xff] %vm784, %v761
      %797 = vst.msk [vmem:[%s262 + $0x60] sm:$0xff] %vm784, %v766
      %798 = vst.msk [vmem:[%s262 + $0x68] sm:$0xff] %vm784, %v771
      %799 = vst.msk [vmem:[%s262 + $0x70] sm:$0xff] %vm784, %v776
      %800 = vst.msk [vmem:[%s262 + $0x78] sm:$0xff] %vm784, %v781
      %s801 = smul.u32 16, %s17
      %p802 = scmp.lt.s32.totalorder %s801, 31
      %s803 = scalar_select %p802, %s801, 31
      %s804 = smul.addr %s803, 4
      %s805 = scalar_lea.vmem %s4, %s804
      %s806 = smul.u32 16, %s17
      %p807 = scmp.lt.s32.totalorder %s806, 31
      %s808 = scalar_select %p807, %s806, 31
      %s809 = smul.addr %s808, 8
      %s810 = scalar_lea.vmem %s5, %s809
      // Predicated region
      $region37: #{tpu_custom_call.1} parent=35 // pred_check
        %p811 = pneg %p129
      $region38: #{tpu_custom_call.1} parent=35 // pred_check_branch
        %813 = sbr.rel (%p811) target = $region40
      $region39: #{tpu_custom_call.1} parent=35 // pred_region
        %s814 = smul.u32 16, %s17
      $region40: #{tpu_custom_call.1} parent=35 // pred_fallthru
        _
      // Predicated region
      $region41: #{tpu_custom_call.1} parent=35 // pred_check
        %p815 = pneg %p155
      $region42: #{tpu_custom_call.1} parent=35 // pred_check_branch
        %817 = sbr.rel (%p815) target = $region44
      $region43: #{tpu_custom_call.1} parent=35 // pred_region
        %s818 = smul.u32 16, %s17
      $region44: #{tpu_custom_call.1} parent=35 // pred_fallthru
        _
    $region36: #{tpu_custom_call.1} parent=5 // pred_fallthru
      _
    %p819 = scmp.le.s32.totalorder 2, %s12
    // Predicated region
    $region45: #{tpu_custom_call.1} parent=5 // pred_check
      %p820 = pneg %p819
    $region46: #{tpu_custom_call.1} parent=5 // pred_check_branch
      %822 = sbr.rel (%p820) target = $region48
    $region47: #{tpu_custom_call.1} parent=5 // pred_region
      %s823 = ssub.s32 %s12, 2
      // Predicated region
      $region49: #{tpu_custom_call.1} parent=47 // pred_check
        %p824 = pneg %p135
      $region50: #{tpu_custom_call.1} parent=47 // pred_check_branch
        %826 = sbr.rel (%p824) target = $region52
      $region51: #{tpu_custom_call.1} parent=47 // pred_region
        %s827 = smul.u32 16, %s18
        %p828 = scmp.lt.s32.totalorder %s827, 31
        %s829 = scalar_select %p828, %s827, 31
        %s830 = smul.addr %s829, 4
        %s831 = scalar_lea.vmem %s4, %s830
      $region52: #{tpu_custom_call.1} parent=47 // pred_fallthru
        _
      // Predicated region
      $region53: #{tpu_custom_call.1} parent=47 // pred_check
        %p832 = pneg %p161
      $region54: #{tpu_custom_call.1} parent=47 // pred_check_branch
        %834 = sbr.rel (%p832) target = $region56
      $region55: #{tpu_custom_call.1} parent=47 // pred_region
        %s835 = smul.u32 16, %s18
        %p836 = scmp.lt.s32.totalorder %s835, 31
        %s837 = scalar_select %p836, %s835, 31
        %s838 = smul.addr %s837, 8
        %s839 = scalar_lea.vmem %s5, %s838
      $region56: #{tpu_custom_call.1} parent=47 // pred_fallthru
        _
    $region48: #{tpu_custom_call.1} parent=5 // pred_fallthru
      _
  $region6: #{tpu_custom_call.1} parent=0 // loop_footer
    %s16 = sadd.s32 1, %s12
  $region7: #{tpu_custom_call.1} parent=0 // loop_footer_branch
    %11 = sbr.rel target = $region3
  $region8: #{tpu_custom_call.1} parent=0 // loop_exit
    _

</llo_original>
